<compile_context>
chip_gen: v6e
topology: v6e:2x2x1
jax: 0.10.0
libtpu: 0.0.40
codegen_flags: <defaults>
</compile_context>

<pallas_src>
import math
import functools

import jax
import jax.numpy as jnp
import numpy as np
from jax.experimental import pallas as pl
from jax.experimental.pallas import tpu as pltpu


def _round_up(x, n):
    return ((x + n - 1) // n) * n


def _vmem_capacity_bytes():
    try:
        return int(pltpu.get_tpu_info().vmem_capacity_bytes)
    except Exception:
        return 64 * 1024 * 1024  # conservative (v7x-sized) fallback


def _arcface_kernel(*refs, cos_m, sin_m, arc_min, margin_min, s,
                    tile_c, n_c_tiles, use_label):
    if use_label:
        tbl_ref, emb_ref, w_ref, inv_e_ref, inv_w_ref, label_ref, out_ref = refs
    else:
        emb_ref, w_ref, inv_e_ref, inv_w_ref, out_ref = refs

    # (TB, D) x (TC, D) contracted on D -> (TB, TC) on the MXU, f32 accumulation.
    # Weight stays in its native (C, D) layout: no transpose anywhere.
    raw = jax.lax.dot_general(
        emb_ref[...], w_ref[...],
        dimension_numbers=(((1,), (1,)), ((), ())),
        preferred_element_type=jnp.float32)

    # Normalize AFTER the matmul with wrapper-precomputed f32 rsqrt norms.
    cos = raw * inv_e_ref[...] * inv_w_ref[...]
    base = cos * s                       # label-free logits, s * cos

    if not use_label:
        out_ref[...] = base.astype(out_ref.dtype)
        return

    c = pl.program_id(0)                 # class-tile index (outer grid axis)
    b = pl.program_id(1)                 # batch-tile index (inner grid axis)
    has_label = tbl_ref[b * n_c_tiles + c] > 0

    @pl.when(jnp.logical_not(has_label))
    def _():
        # No label of this batch tile lands in this class tile: skip the whole
        # sin/phi VPU chain (common when C / tile_c is large).
        out_ref[...] = base.astype(out_ref.dtype)

    @pl.when(has_label)
    def _():
        # clamp BEFORE the sqrt so cos^2 > 1 float error cannot produce NaN.
        sin = jnp.sqrt(jnp.clip(1.0 - cos * cos, 0.0, 1.0))
        phi = cos * cos_m - sin * sin_m
        phi = jnp.where(cos > arc_min, phi, cos - margin_min)
        col = c * tile_c + jax.lax.broadcasted_iota(jnp.int32, cos.shape, 1)
        out_ref[...] = jnp.where(col == label_ref[...], phi * s, base).astype(out_ref.dtype)


def arcface_forward(embedding, weight, label=None, *, s=30.0, m=0.5,
                    tile_b=None, tile_c=None, matmul_dtype=None,
                    out_dtype=jnp.float32):
    """JAX/Pallas equivalent of ArcFace.forward.

    embedding:     (B, D) float
    weight:        (C, D) float (PyTorch nn.Linear layout; kept un-transposed)
    label:         optional (B,) int
    matmul_dtype:  optional dtype for the MXU operands (e.g. jnp.bfloat16 to
                   halve weight DMA); norms/margin math stay f32.
    """
    B, D = embedding.shape
    C, D2 = weight.shape
    assert D == D2

    cos_m = math.cos(m)
    sin_m = math.sin(m)
    arc_min = math.cos(math.pi - m)
    margin_min = math.sin(math.pi - m) * m

    vmem_cap = _vmem_capacity_bytes()
    big_vmem = vmem_cap >= 96 * 1024 * 1024          # v5e/v6e: 128 MiB; v7x: 64 MiB

    mm_dtype = jnp.dtype(matmul_dtype) if matmul_dtype is not None else jnp.dtype(embedding.dtype)
    op_elt = mm_dtype.itemsize

    # --- tile sizes (generation-aware) -------------------------------------
    if tile_b is None:
        # Cover the whole batch in one tile when possible (weight then streams
        # exactly once); cap at 512 to bound the f32 output tile.
        tile_b = min(512, _round_up(B, 8))
    if tile_c is None:
        w_budget = (16 if big_vmem else 4) * 1024 * 1024     # weight-tile budget
        out_budget = (16 if big_vmem else 8) * 1024 * 1024   # f32 output-tile budget
        max_tc = 8192 if big_vmem else 2048
        tc_w = max(128, (w_budget // (op_elt * max(D, 1))) // 128 * 128)
        tc_o = max(128, (out_budget // (4 * max(tile_b, 1))) // 128 * 128)
        tile_c = int(min(max_tc, tc_w, tc_o, _round_up(C, 128)))

    B_pad = _round_up(B, tile_b)
    C_pad = _round_up(C, tile_c)
    n_b = B_pad // tile_b
    n_c = C_pad // tile_c

    # --- prepare operands ----------------------------------------------------
    # Norms computed ONCE from full-precision data (required when the MXU
    # operands are later cast to bf16).
    emb_f32 = embedding.astype(jnp.float32)
    w_f32 = weight.astype(jnp.float32)
    inv_e = jax.lax.rsqrt(jnp.maximum(jnp.sum(emb_f32 * emb_f32, axis=-1, keepdims=True), 1e-24))
    inv_w = jax.lax.rsqrt(jnp.maximum(jnp.sum(w_f32 * w_f32, axis=-1), 1e-24)).reshape(1, C)

    emb_in = embedding.astype(mm_dtype)
    w_in = weight.astype(mm_dtype)
    # Padding (only when shapes aren't tile-aligned).  In production, store the
    # weight pre-padded to C_pad to avoid this HBM pass.  Padded inv_e/inv_w are
    # zero, so padded cos is exactly 0 and gets sliced off below.
    if B_pad != B:
        emb_in = jnp.pad(emb_in, ((0, B_pad - B), (0, 0)))
        inv_e = jnp.pad(inv_e, ((0, B_pad - B), (0, 0)))
    if C_pad != C:
        w_in = jnp.pad(w_in, ((0, C_pad - C), (0, 0)))
        inv_w = jnp.pad(inv_w, ((0, 0), (0, C_pad - C)))

    # --- BlockSpecs: class axis OUTER, batch axis INNER ----------------------
    idx_emb = lambda c, b, *_: (b, 0)      # streamed along the inner batch axis
    idx_w   = lambda c, b, *_: (c, 0)      # constant across inner axis -> resident
    idx_ie  = lambda c, b, *_: (b, 0)
    idx_iw  = lambda c, b, *_: (0, c)
    idx_lab = lambda c, b, *_: (b, 0)
    idx_out = lambda c, b, *_: (b, c)

    emb_spec_kwargs = {}
    w_spec_kwargs = {}
    if big_vmem:
        # Triple-buffer whichever operand is actually streamed every grid step
        # (cheap on 128-MiB-VMEM parts; skipped on v7x).
        if n_b == 1 and n_c >= 3:
            w_spec_kwargs["pipeline_mode"] = pl.Buffered(3)
        elif n_b >= 3:
            emb_spec_kwargs["pipeline_mode"] = pl.Buffered(3)

    in_specs = [
        pl.BlockSpec((tile_b, D), idx_emb, **emb_spec_kwargs),
        pl.BlockSpec((tile_c, D), idx_w, **w_spec_kwargs),
        pl.BlockSpec((tile_b, 1), idx_ie),
        pl.BlockSpec((1, tile_c), idx_iw),
    ]
    inputs = [emb_in, w_in, inv_e, inv_w]

    use_label = label is not None
    num_prefetch = 0
    if use_label:
        lab = jnp.asarray(label).reshape(-1).astype(jnp.int32)
        # Scalar-prefetched (n_b * n_c) table: does tile (b, c) contain a label?
        b_idx = jnp.arange(B, dtype=jnp.int32) // tile_b
        tbl = jnp.zeros((n_b * n_c,), jnp.int32).at[b_idx * n_c + lab // tile_c].set(1)
        lab_pad = lab
        if B_pad != B:
            lab_pad = jnp.pad(lab_pad, (0, B_pad - B), constant_values=-1)
        lab_pad = lab_pad.reshape(B_pad, 1)
        inputs = [tbl] + inputs + [lab_pad]
        in_specs = in_specs + [pl.BlockSpec((tile_b, 1), idx_lab)]
        num_prefetch = 1

    kernel = functools.partial(
        _arcface_kernel,
        cos_m=cos_m, sin_m=sin_m, arc_min=arc_min, margin_min=margin_min,
        s=float(s), tile_c=tile_c, n_c_tiles=n_c, use_label=use_label,
    )

    grid_spec = pltpu.PrefetchScalarGridSpec(
        num_scalar_prefetch=num_prefetch,
        grid=(n_c, n_b),
        in_specs=in_specs,
        out_specs=pl.BlockSpec((tile_b, tile_c), idx_out),
    )

    # VMEM budget: double-buffered tiles + slack, capped below physical VMEM.
    tile_bytes = (op_elt * tile_c * D          # weight tile
                  + op_elt * tile_b * D        # embedding tile
                  + 4 * tile_b * tile_c        # f32 output tile
                  + 4 * (tile_c + 2 * tile_b)) # inv_w, inv_e, label
    vmem_limit = int(min(vmem_cap * 3 // 4,
                         max(3 * tile_bytes + (4 << 20), 8 << 20)))

    out = pl.pallas_call(
        kernel,
        out_shape=jax.ShapeDtypeStruct((B_pad, C_pad), out_dtype),
        grid_spec=grid_spec,
        compiler_params=pltpu.CompilerParams(
            # TODO(synk): on v7x verify the 2-TC split; otherwise mark the class
            # axis pltpu.CORE_PARALLEL (or use a leading core axis + core_map).
            dimension_semantics=("parallel", "parallel"),
            vmem_limit_bytes=vmem_limit,
        ),
    )(*inputs)

    if B_pad != B or C_pad != C:
        out = out[:B, :C]
    return out


# --------------------------- references (numpy) -------------------------------

def _margin_and_scale(cos, label, s, m):
    sin = np.sqrt(np.clip(1.0 - cos * cos, 0.0, 1.0))
    phi = cos * math.cos(m) - sin * math.sin(m)
    phi = np.where(cos > math.cos(math.pi - m), phi, cos - math.sin(math.pi - m) * m)
    if label is None:
        return cos * s
    lab = np.asarray(label)
    out = cos.copy()
    rows = np.arange(cos.shape[0])
    out[rows, lab] = phi[rows, lab]
    return out * s


def _arcface_reference(embedding, weight, label, s, m):
    """Pure numpy (float64) reference mirroring the PyTorch module."""
    emb = np.asarray(embedding, dtype=np.float64)
    w = np.asarray(weight, dtype=np.float64)

    def norm(x):
        n = np.sqrt((x * x).sum(-1, keepdims=True))
        return x / np.maximum(n, 1e-12)

    cos = norm(emb) @ norm(w).T
    return _margin_and_scale(cos, label, s, m)


def _arcface_reference_bf16_ops(embedding, weight, label, s, m):
    """Reference matching the bf16-MXU-operand path: bf16-rounded operands,
    exact accumulation, f32-derived norms."""
    emb_bf = np.asarray(jnp.asarray(embedding).astype(jnp.bfloat16).astype(jnp.float32),
                        dtype=np.float64)
    w_bf = np.asarray(jnp.asarray(weight).astype(jnp.bfloat16).astype(jnp.float32),
                      dtype=np.float64)
    e64 = np.asarray(embedding, dtype=np.float64)
    w64 = np.asarray(weight, dtype=np.float64)
    inv_e = 1.0 / np.maximum(np.sqrt((e64 * e64).sum(-1, keepdims=True)), 1e-12)
    inv_w = 1.0 / np.maximum(np.sqrt((w64 * w64).sum(-1, keepdims=True)), 1e-12)
    cos = (emb_bf @ w_bf.T) * inv_e * inv_w.T
    return _margin_and_scale(cos, label, s, m)


if __name__ == "__main__":
    B = 16
    IN_FEATURES = 32
    OUT_FEATURES = 384   # 3 class tiles of 128 at the demo tile sizes

    key = jax.random.PRNGKey(0)
    k_emb, k_w, k_lab = jax.random.split(key, 3)

    embedding = jax.random.normal(k_emb, (B, IN_FEATURES), dtype=jnp.float32)
    # nn.init.xavier_uniform_ on a (out, in) weight
    bound = math.sqrt(6.0 / (IN_FEATURES + OUT_FEATURES))
    weight = jax.random.uniform(k_w, (OUT_FEATURES, IN_FEATURES),
                                dtype=jnp.float32, minval=-bound, maxval=bound)
    label = jax.random.randint(k_lab, (B,), 0, OUT_FEATURES, dtype=jnp.int32)

    # 1) labeled path, small explicit tiles -> real (class x batch) grid,
    #    exercises the label-gated margin epilogue.
    logits = arcface_forward(embedding, weight, label, s=30.0, m=0.5,
                             tile_b=8, tile_c=128)
    jax.block_until_ready(logits)

    # 2) label=None path with auto (generation-aware) tiling.
    logits_nolabel = arcface_forward(embedding, weight, None, s=30.0, m=0.5)
    jax.block_until_ready(logits_nolabel)

    # 3) bf16 MXU-operand path (halves weight DMA); norms stay f32.
    logits_bf16 = arcface_forward(embedding, weight, label, s=30.0, m=0.5,
                                  tile_b=8, tile_c=128,
                                  matmul_dtype=jnp.bfloat16)
    jax.block_until_ready(logits_bf16)

    assert logits.shape == (B, OUT_FEATURES)
    assert logits_nolabel.shape == (B, OUT_FEATURES)
    assert logits_bf16.shape == (B, OUT_FEATURES)
    assert bool(jnp.isfinite(logits).all())
    assert bool(jnp.isfinite(logits_nolabel).all())
    assert bool(jnp.isfinite(logits_bf16).all())

    ref = _arcface_reference(embedding, weight, label, 30.0, 0.5)
    ref_nolabel = _arcface_reference(embedding, weight, None, 30.0, 0.5)
    ref_bf16 = _arcface_reference_bf16_ops(embedding, weight, label, 30.0, 0.5)

    assert np.allclose(np.asarray(logits), ref, atol=5e-2, rtol=5e-3), \
        float(np.abs(np.asarray(logits) - ref).max())
    assert np.allclose(np.asarray(logits_nolabel), ref_nolabel, atol=5e-2, rtol=5e-3), \
        float(np.abs(np.asarray(logits_nolabel) - ref_nolabel).max())
    assert np.allclose(np.asarray(logits_bf16), ref_bf16, atol=1e-2, rtol=1e-2), \
        float(np.abs(np.asarray(logits_bf16) - ref_bf16).max())

    print("KERNEL_OK")
</pallas_src>

<mosaic_0001>
module attributes {stable_mosaic.version = 11 : i64} {
  func.func @_arcface_kernel(%arg0: i32, %arg1: i32, %arg2: memref<6xi32, #tpu.memory_space<smem>>, %arg3: memref<8x32xf32, #tpu.memory_space<vmem>>, %arg4: memref<128x32xf32, #tpu.memory_space<vmem>>, %arg5: memref<8x1xf32, #tpu.memory_space<vmem>>, %arg6: memref<1x128xf32, #tpu.memory_space<vmem>>, %arg7: memref<8x1xi32, #tpu.memory_space<vmem>>, %arg8: memref<8x128xf32, #tpu.memory_space<vmem>>) attributes {dimension_semantics = [#tpu.dimension_semantics<parallel>, #tpu.dimension_semantics<parallel>], iteration_bounds = array<i64: 3, 2>, scalar_prefetch = 1 : i64, scratch_operands = 0 : i64, tpu.core_type = #tpu.core_type<tc>, window_params = [{transform_indices = @transform_0, window_bounds = array<i64: 8, 32>}, {transform_indices = @transform_1, window_bounds = array<i64: 128, 32>}, {transform_indices = @transform_2, window_bounds = array<i64: 8, 1>}, {transform_indices = @transform_3, window_bounds = array<i64: 1, 128>}, {transform_indices = @transform_4, window_bounds = array<i64: 8, 1>}, {transform_indices = @transform_5, window_bounds = array<i64: 8, 128>}]} {
    %c0 = arith.constant 0 : index
    %c0_0 = arith.constant 0 : index
    %0 = vector.load %arg3[%c0, %c0_0] : memref<8x32xf32, #tpu.memory_space<vmem>>, vector<8x32xf32>
    %c0_1 = arith.constant 0 : index
    %c0_2 = arith.constant 0 : index
    %1 = vector.load %arg4[%c0_1, %c0_2] : memref<128x32xf32, #tpu.memory_space<vmem>>, vector<128x32xf32>
    %cst = arith.constant dense<0.000000e+00> : vector<8x128xf32>
    %2 = tpu.matmul %0, %1, %cst {dimension_numbers = #tpu.dot_dimension_numbers<[1], [1], [0], [0], [0, 0, 1, 0], [], []>} : vector<8x32xf32>, vector<128x32xf32>, vector<8x128xf32> -> vector<8x128xf32>
    %c0_3 = arith.constant 0 : index
    %c0_4 = arith.constant 0 : index
    %3 = vector.load %arg5[%c0_3, %c0_4] : memref<8x1xf32, #tpu.memory_space<vmem>>, vector<8x1xf32>
    %4 = vector.broadcast %3 : vector<8x1xf32> to vector<8x128xf32>
    %5 = arith.mulf %2, %4 : vector<8x128xf32>
    %c0_5 = arith.constant 0 : index
    %c0_6 = arith.constant 0 : index
    %6 = vector.load %arg6[%c0_5, %c0_6] : memref<1x128xf32, #tpu.memory_space<vmem>>, vector<1x128xf32>
    %7 = vector.broadcast %6 : vector<1x128xf32> to vector<8x128xf32>
    %8 = arith.mulf %5, %7 : vector<8x128xf32>
    %cst_7 = arith.constant 3.000000e+01 : f32
    %9 = vector.broadcast %cst_7 : f32 to vector<8x128xf32>
    %10 = arith.mulf %8, %9 : vector<8x128xf32>
    %c3_i32 = arith.constant 3 : i32
    %11 = arith.muli %arg1, %c3_i32 : i32
    %12 = arith.addi %11, %arg0 : i32
    %13 = arith.index_cast %12 : i32 to index
    %14 = memref.load %arg2[%13] : memref<6xi32, #tpu.memory_space<smem>>
    %c0_i32 = arith.constant 0 : i32
    %15 = arith.cmpi sgt, %14, %c0_i32 : i32
    %true = arith.constant true
    %16 = arith.xori %15, %true : i1
    %17 = arith.extui %16 : i1 to i32
    %c0_i32_8 = arith.constant 0 : i32
    %18 = arith.cmpi ne, %17, %c0_i32_8 : i32
    scf.if %18 {
      %c0_10 = arith.constant 0 : index
      %c0_11 = arith.constant 0 : index
      %21 = vector.load %arg8[%c0_10, %c0_11] : memref<8x128xf32, #tpu.memory_space<vmem>>, vector<8x128xf32>
      tpu.vector_store %arg8[%c0_10, %c0_11], %10 {strides = array<i32>} : memref<8x128xf32, #tpu.memory_space<vmem>>, vector<8x128xf32>,
    } else {
    }
    %19 = arith.extui %15 : i1 to i32
    %c0_i32_9 = arith.constant 0 : i32
    %20 = arith.cmpi ne, %19, %c0_i32_9 : i32
    scf.if %20 {
      %21 = arith.mulf %8, %8 : vector<8x128xf32>
      %cst_10 = arith.constant 1.000000e+00 : f32
      %22 = vector.broadcast %cst_10 : f32 to vector<8x128xf32>
      %23 = arith.subf %22, %21 : vector<8x128xf32>
      %cst_11 = arith.constant 0.000000e+00 : f32
      %cst_12 = arith.constant 1.000000e+00 : f32
      %24 = vector.broadcast %cst_11 : f32 to vector<8x128xf32>
      %25 = arith.maximumf %24, %23 : vector<8x128xf32>
      %26 = vector.broadcast %cst_12 : f32 to vector<8x128xf32>
      %27 = arith.minimumf %26, %25 : vector<8x128xf32>
      %28 = math.sqrt %27 : vector<8x128xf32>
      %cst_13 = arith.constant 0.87758255 : f32
      %29 = vector.broadcast %cst_13 : f32 to vector<8x128xf32>
      %30 = arith.mulf %8, %29 : vector<8x128xf32>
      %cst_14 = arith.constant 0.47942555 : f32
      %31 = vector.broadcast %cst_14 : f32 to vector<8x128xf32>
      %32 = arith.mulf %28, %31 : vector<8x128xf32>
      %33 = arith.subf %30, %32 : vector<8x128xf32>
      %cst_15 = arith.constant -0.87758255 : f32
      %34 = vector.broadcast %cst_15 : f32 to vector<8x128xf32>
      %35 = arith.cmpf ogt, %8, %34 : vector<8x128xf32>
      %cst_16 = arith.constant 0.239712775 : f32
      %36 = vector.broadcast %cst_16 : f32 to vector<8x128xf32>
      %37 = arith.subf %8, %36 : vector<8x128xf32>
      %38 = arith.select %35, %33, %37 : vector<8x128xi1>, vector<8x128xf32>
      %c128_i32 = arith.constant 128 : i32
      %39 = arith.muli %arg0, %c128_i32 : i32
      %40 = tpu.iota {dimensions = array<i32: 1>} : vector<8x128xi32>
      %41 = vector.broadcast %39 : i32 to vector<8x128xi32>
      %42 = arith.addi %41, %40 : vector<8x128xi32>
      %c0_17 = arith.constant 0 : index
      %c0_18 = arith.constant 0 : index
      %43 = vector.load %arg7[%c0_17, %c0_18] : memref<8x1xi32, #tpu.memory_space<vmem>>, vector<8x1xi32>
      %44 = vector.broadcast %43 : vector<8x1xi32> to vector<8x128xi32>
      %45 = arith.cmpi eq, %42, %44 : vector<8x128xi32>
      %cst_19 = arith.constant 3.000000e+01 : f32
      %46 = vector.broadcast %cst_19 : f32 to vector<8x128xf32>
      %47 = arith.mulf %38, %46 : vector<8x128xf32>
      %48 = arith.select %45, %47, %10 : vector<8x128xi1>, vector<8x128xf32>
      %c0_20 = arith.constant 0 : index
      %c0_21 = arith.constant 0 : index
      %49 = vector.load %arg8[%c0_20, %c0_21] : memref<8x128xf32, #tpu.memory_space<vmem>>, vector<8x128xf32>
      tpu.vector_store %arg8[%c0_20, %c0_21], %48 {strides = array<i32>} : memref<8x128xf32, #tpu.memory_space<vmem>>, vector<8x128xf32>,
    } else {
    }
    return
  }
  func.func @transform_0(%arg0: i32, %arg1: i32, %arg2: memref<6xi32, #tpu.memory_space<smem>>) -> (i32, i32) {
    %c0_i32 = arith.constant 0 : i32
    %c0_i32_0 = arith.constant 0 : i32
    return %arg1, %c0_i32 : i32, i32
  }
  func.func @transform_1(%arg0: i32, %arg1: i32, %arg2: memref<6xi32, #tpu.memory_space<smem>>) -> (i32, i32) {
    %c0_i32 = arith.constant 0 : i32
    %c0_i32_0 = arith.constant 0 : i32
    return %arg0, %c0_i32 : i32, i32
  }
  func.func @transform_2(%arg0: i32, %arg1: i32, %arg2: memref<6xi32, #tpu.memory_space<smem>>) -> (i32, i32) {
    %c0_i32 = arith.constant 0 : i32
    %c0_i32_0 = arith.constant 0 : i32
    return %arg1, %c0_i32 : i32, i32
  }
  func.func @transform_3(%arg0: i32, %arg1: i32, %arg2: memref<6xi32, #tpu.memory_space<smem>>) -> (i32, i32) {
    %c0_i32 = arith.constant 0 : i32
    %c0_i32_0 = arith.constant 0 : i32
    return %c0_i32, %arg0 : i32, i32
  }
  func.func @transform_4(%arg0: i32, %arg1: i32, %arg2: memref<6xi32, #tpu.memory_space<smem>>) -> (i32, i32) {
    %c0_i32 = arith.constant 0 : i32
    %c0_i32_0 = arith.constant 0 : i32
    return %arg1, %c0_i32 : i32, i32
  }
  func.func @transform_5(%arg0: i32, %arg1: i32, %arg2: memref<6xi32, #tpu.memory_space<smem>>) -> (i32, i32) {
    %c0_i32 = arith.constant 0 : i32
    return %arg1, %arg0 : i32, i32
  }
}

</mosaic_0001>

<llo_original>
// kernel: tpu_custom_call.1
$region0: #{tpu_custom_call.1}
  #allocation0 [shape = 'u32[]', space=smem, size = 0x4, offset = 0x4, fixed_abs, tag = 'smem constant byte address 0x4 - core index']
  #allocation1 [shape = 'u32[144,128]{1,0:T(1,128)}', space=vmem, size = 0x12000, scoped, tag = 'internal scratch']
  #allocation2 [shape = 's32[1]{0}', space=sflag, size = 0x4, scoped, tag = 'scoped memory for tpu_custom_call.1']
  #allocation3 [shape = 'u8[512]{0}', space=smem, size = 0x200, scoped, tag = 'prefetched SMEM operand 0']
  %s0 = inlined_call_operand.vmem [shape: s32[6], index: 0, kind: input, shape index: {}]
  %s1 = inlined_call_operand.vmem [shape: f32[16,32], index: 1, kind: input, shape index: {}]
  %s2 = inlined_call_operand.vmem [shape: f32[384,32], index: 2, kind: input, shape index: {}]
  %s3 = inlined_call_operand.vmem [shape: f32[16,1], index: 3, kind: input, shape index: {}]
  %s4 = inlined_call_operand.vmem [shape: f32[1,384], index: 4, kind: input, shape index: {}]
  %s5 = inlined_call_operand.vmem [shape: s32[16,1], index: 5, kind: input, shape index: {}]
  %s6 = inlined_call_operand.hbm [shape: f32[16,384], index: 6, kind: output, shape index: {}]
  %s7 = sld [smem:[#allocation0]]
  $region61: #{tpu_custom_call.1} parent=0
    _
  %s9 = ssub.s32 1, %s7
  %s10 = scalar_select 0, %s9, %s7
  %s11 = sshll.u32 %s0, 4
  %s12 = int_to_ptr.vmem [resolvable:$true] %s11
  %14 = dma.vmem_to_smem %s12, 16, [#allocation3], [#allocation2]
  %15 = dma.done [#allocation2], 16
  %16 = sfence
  $region1: #{tpu_custom_call.1} parent=0
    #allocation4 [shape = 'u8[8192]{0}', space=vmem, size = 0x2000, scoped, tag = 'output window, operand 0']
    #allocation5 [shape = 's32[2]{0}', space=sflag, size = 0x8, scoped, tag = 'scoped memory for tpu_custom_call.1']
    %17 = vsyncpa [#allocation5], 0
    %s18 = scalar_lea.sflag [#allocation5], 1
    %19 = vsyncpa %s18, 0
    loop: start=0, step=1, limit=8
    $region2: #{tpu_custom_call.1} parent=1 // loop_pre_header
      _
    $region3: #{tpu_custom_call.1} parent=1 // loop_header
      %s21 = sphi 0, %s25
      %p22 = scmp.ge.s32.totalorder %s21, 8
      %s28 = sphi 0, %s40
      %s29 = sphi 0, %s36
      %s30 = sphi 0, %s28
      %s31 = sphi 0, %s29
      %s32 = sphi 0, %s30
      %s33 = sphi 0, %s31
      %s43 = sphi 0, %s45
      %s46 = sphi 0, %s43
      %s47 = sphi 0, %s46
      %s63 = sphi 0, %s47
      %s69 = sphi 0, %s71
      %s72 = sphi 0, %s69
      %s73 = sphi 0, %s72
      %s89 = sphi 0, %s73
      %s95 = sphi 0, %s97
      %s98 = sphi 0, %s95
      %s99 = sphi 0, %s98
      %s115 = sphi 0, %s99
      %s121 = sphi 0, %s123
      %s124 = sphi 0, %s121
      %s125 = sphi 0, %s124
      %s141 = sphi 0, %s125
      %s147 = sphi 0, %s149
      %s150 = sphi 0, %s147
      %s151 = sphi 0, %s150
      %s167 = sphi 0, %s151
      %s175 = sphi 0, %s177
      %s178 = sphi 0, %s175
      %s179 = sphi 0, %s178
      %s195 = sphi 0, %s179
    $region4: #{tpu_custom_call.1} parent=1 // loop_header_branch
      %24 = sbr.rel (%p22) target = $region8
    $region5: #{tpu_custom_call.1} parent=1 // loop_body
      %s26 = ssub.s32 %s21, 1
      %s27 = ssub.s32 %s21, 2
      %s34 = sadd.s32 1, %s29
      %p35 = scmp.ge.s32.totalorder %s34, 2
      %s36 = scalar_select %p35, 0, %s34
      %s37 = sadd.s32 1, %s28
      %s38 = scalar_select %p35, %s37, %s28
      %p39 = scmp.ge.s32.totalorder %s38, 3
      %s40 = scalar_select %p39, 0, %s38
      %s41 = ssub.s32 %s29, %s36
      %p42 = scmp.eq.s32.totalorder %s41, 0
      %s44 = sadd.s32 %s43, 1
      %s45 = scalar_select %p42, %s43, %s44
      %p48 = pneg %p42
      %p49 = scmp.eq.s32.totalorder %s21, 5
      %p50 = por %p48, %p49
      %p51 = scmp.ne.s32.totalorder %s43, %s46
      %p52 = scmp.eq.s32.totalorder %s21, 0
      %p53 = por %p51, %p52
      %p54 = scmp.ne.s32.totalorder %s43, %s46
      %p55 = scmp.eq.s32.totalorder %s26, 5
      %p56 = por %p54, %p55
      %p57 = scmp.ne.s32.totalorder %s46, %s47
      %p58 = scmp.eq.s32.totalorder %s26, 0
      %p59 = por %p57, %p58
      %p60 = scmp.ne.s32.totalorder %s46, %s47
      %p61 = scmp.eq.s32.totalorder %s27, 5
      %p62 = por %p60, %p61
      %p64 = scmp.ne.s32.totalorder %s47, %s63
      %p65 = scmp.eq.s32.totalorder %s27, 0
      %p66 = por %p64, %p65
      %s67 = ssub.s32 %s28, %s40
      %p68 = scmp.eq.s32.totalorder %s67, 0
      %s70 = sadd.s32 %s69, 1
      %s71 = scalar_select %p68, %s69, %s70
      %p74 = pneg %p68
      %p75 = scmp.eq.s32.totalorder %s21, 5
      %p76 = por %p74, %p75
      %p77 = scmp.ne.s32.totalorder %s69, %s72
      %p78 = scmp.eq.s32.totalorder %s21, 0
      %p79 = por %p77, %p78
      %p80 = scmp.ne.s32.totalorder %s69, %s72
      %p81 = scmp.eq.s32.totalorder %s26, 5
      %p82 = por %p80, %p81
      %p83 = scmp.ne.s32.totalorder %s72, %s73
      %p84 = scmp.eq.s32.totalorder %s26, 0
      %p85 = por %p83, %p84
      %p86 = scmp.ne.s32.totalorder %s72, %s73
      %p87 = scmp.eq.s32.totalorder %s27, 5
      %p88 = por %p86, %p87
      %p90 = scmp.ne.s32.totalorder %s73, %s89
      %p91 = scmp.eq.s32.totalorder %s27, 0
      %p92 = por %p90, %p91
      %s93 = ssub.s32 %s29, %s36
      %p94 = scmp.eq.s32.totalorder %s93, 0
      %s96 = sadd.s32 %s95, 1
      %s97 = scalar_select %p94, %s95, %s96
      %p100 = pneg %p94
      %p101 = scmp.eq.s32.totalorder %s21, 5
      %p102 = por %p100, %p101
      %p103 = scmp.ne.s32.totalorder %s95, %s98
      %p104 = scmp.eq.s32.totalorder %s21, 0
      %p105 = por %p103, %p104
      %p106 = scmp.ne.s32.totalorder %s95, %s98
      %p107 = scmp.eq.s32.totalorder %s26, 5
      %p108 = por %p106, %p107
      %p109 = scmp.ne.s32.totalorder %s98, %s99
      %p110 = scmp.eq.s32.totalorder %s26, 0
      %p111 = por %p109, %p110
      %p112 = scmp.ne.s32.totalorder %s98, %s99
      %p113 = scmp.eq.s32.totalorder %s27, 5
      %p114 = por %p112, %p113
      %p116 = scmp.ne.s32.totalorder %s99, %s115
      %p117 = scmp.eq.s32.totalorder %s27, 0
      %p118 = por %p116, %p117
      %s119 = ssub.s32 %s28, %s40
      %p120 = scmp.eq.s32.totalorder %s119, 0
      %s122 = sadd.s32 %s121, 1
      %s123 = scalar_select %p120, %s121, %s122
      %p126 = pneg %p120
      %p127 = scmp.eq.s32.totalorder %s21, 5
      %p128 = por %p126, %p127
      %p129 = scmp.ne.s32.totalorder %s121, %s124
      %p130 = scmp.eq.s32.totalorder %s21, 0
      %p131 = por %p129, %p130
      %p132 = scmp.ne.s32.totalorder %s121, %s124
      %p133 = scmp.eq.s32.totalorder %s26, 5
      %p134 = por %p132, %p133
      %p135 = scmp.ne.s32.totalorder %s124, %s125
      %p136 = scmp.eq.s32.totalorder %s26, 0
      %p137 = por %p135, %p136
      %p138 = scmp.ne.s32.totalorder %s124, %s125
      %p139 = scmp.eq.s32.totalorder %s27, 5
      %p140 = por %p138, %p139
      %p142 = scmp.ne.s32.totalorder %s125, %s141
      %p143 = scmp.eq.s32.totalorder %s27, 0
      %p144 = por %p142, %p143
      %s145 = ssub.s32 %s29, %s36
      %p146 = scmp.eq.s32.totalorder %s145, 0
      %s148 = sadd.s32 %s147, 1
      %s149 = scalar_select %p146, %s147, %s148
      %p152 = pneg %p146
      %p153 = scmp.eq.s32.totalorder %s21, 5
      %p154 = por %p152, %p153
      %p155 = scmp.ne.s32.totalorder %s147, %s150
      %p156 = scmp.eq.s32.totalorder %s21, 0
      %p157 = por %p155, %p156
      %p158 = scmp.ne.s32.totalorder %s147, %s150
      %p159 = scmp.eq.s32.totalorder %s26, 5
      %p160 = por %p158, %p159
      %p161 = scmp.ne.s32.totalorder %s150, %s151
      %p162 = scmp.eq.s32.totalorder %s26, 0
      %p163 = por %p161, %p162
      %p164 = scmp.ne.s32.totalorder %s150, %s151
      %p165 = scmp.eq.s32.totalorder %s27, 5
      %p166 = por %p164, %p165
      %p168 = scmp.ne.s32.totalorder %s151, %s167
      %p169 = scmp.eq.s32.totalorder %s27, 0
      %p170 = por %p168, %p169
      %s171 = ssub.s32 %s29, %s36
      %s172 = ssub.s32 %s28, %s40
      %s173 = sor.u32 %s171, %s172
      %p174 = scmp.eq.s32.totalorder %s173, 0
      %s176 = sadd.s32 %s175, 1
      %s177 = scalar_select %p174, %s175, %s176
      %p180 = pneg %p174
      %p181 = scmp.eq.s32.totalorder %s21, 5
      %p182 = por %p180, %p181
      %p183 = scmp.ne.s32.totalorder %s175, %s178
      %p184 = scmp.eq.s32.totalorder %s21, 0
      %p185 = por %p183, %p184
      %p186 = scmp.ne.s32.totalorder %s175, %s178
      %p187 = scmp.eq.s32.totalorder %s26, 5
      %p188 = por %p186, %p187
      %p189 = scmp.ne.s32.totalorder %s178, %s179
      %p190 = scmp.eq.s32.totalorder %s26, 0
      %p191 = por %p189, %p190
      %p192 = scmp.ne.s32.totalorder %s178, %s179
      %p193 = scmp.eq.s32.totalorder %s27, 5
      %p194 = por %p192, %p193
      %p196 = scmp.ne.s32.totalorder %s179, %s195
      %p197 = scmp.eq.s32.totalorder %s27, 0
      %p198 = por %p196, %p197
      %p199 = scmp.le.s32.totalorder 1, %s21
      %p200 = scmp.lt.s32.totalorder %s21, 7
      %p201 = pnand %p199, %p200
      %p202 = pneg %p201
      // Predicated region
      $region9: #{tpu_custom_call.1} parent=5 // pred_check
        _
      $region10: #{tpu_custom_call.1} parent=5 // pred_check_branch
        %204 = sbr.rel (%p201) target = $region12
      $region11: #{tpu_custom_call.1} parent=5 // pred_region
        %s205 = ssub.s32 %s21, 1
      $region12: #{tpu_custom_call.1} parent=5 // pred_fallthru
        _
      %p206 = scmp.lt.s32.totalorder %s21, 6
      // Predicated region
      $region13: #{tpu_custom_call.1} parent=5 // pred_check
        %p207 = pneg %p206
      $region14: #{tpu_custom_call.1} parent=5 // pred_check_branch
        %209 = sbr.rel (%p207) target = $region16
      $region15: #{tpu_custom_call.1} parent=5 // pred_region
        // Predicated region
        $region17: #{tpu_custom_call.1} parent=15 // pred_check
          %p210 = pneg %p53
        $region18: #{tpu_custom_call.1} parent=15 // pred_check_branch
          %212 = sbr.rel (%p210) target = $region20
        $region19: #{tpu_custom_call.1} parent=15 // pred_region
          %p213 = scmp.lt.s32.totalorder %s29, 1
          %s214 = scalar_select %p213, %s29, 1
          %s215 = smul.addr %s214, 8
          %s216 = scalar_lea.vmem %s1, %s215
        $region20: #{tpu_custom_call.1} parent=15 // pred_fallthru
          _
        // Predicated region
        $region21: #{tpu_custom_call.1} parent=15 // pred_check
          %p217 = pneg %p79
        $region22: #{tpu_custom_call.1} parent=15 // pred_check_branch
          %219 = sbr.rel (%p217) target = $region24
        $region23: #{tpu_custom_call.1} parent=15 // pred_region
          %s220 = smul.u32 16, %s28
          %p221 = scmp.lt.s32.totalorder %s220, 47
          %s222 = scalar_select %p221, %s220, 47
          %s223 = smul.addr %s222, 8
          %s224 = scalar_lea.vmem %s2, %s223
          %s225 = smul.u32 16, %s28
        $region24: #{tpu_custom_call.1} parent=15 // pred_fallthru
          _
        // Predicated region
        $region25: #{tpu_custom_call.1} parent=15 // pred_check
          %p226 = pneg %p105
        $region26: #{tpu_custom_call.1} parent=15 // pred_check_branch
          %228 = sbr.rel (%p226) target = $region28
        $region27: #{tpu_custom_call.1} parent=15 // pred_region
          %p229 = scmp.lt.s32.totalorder %s29, 1
          %s230 = scalar_select %p229, %s29, 1
          %s231 = smul.addr %s230, 8
          %s232 = scalar_lea.vmem %s3, %s231
        $region28: #{tpu_custom_call.1} parent=15 // pred_fallthru
          _
        // Predicated region
        $region29: #{tpu_custom_call.1} parent=15 // pred_check
          %p233 = pneg %p131
        $region30: #{tpu_custom_call.1} parent=15 // pred_check_branch
          %235 = sbr.rel (%p233) target = $region32
        $region31: #{tpu_custom_call.1} parent=15 // pred_region
          %p236 = scmp.lt.s32.totalorder %s28, 2
          %s237 = scalar_select %p236, %s28, 2
          %s238 = scalar_lea.vmem %s4, %s237
        $region32: #{tpu_custom_call.1} parent=15 // pred_fallthru
          _
        // Predicated region
        $region33: #{tpu_custom_call.1} parent=15 // pred_check
          %p239 = pneg %p157
        $region34: #{tpu_custom_call.1} parent=15 // pred_check_branch
          %241 = sbr.rel (%p239) target = $region36
        $region35: #{tpu_custom_call.1} parent=15 // pred_region
          %p242 = scmp.lt.s32.totalorder %s29, 1
          %s243 = scalar_select %p242, %s29, 1
          %s244 = smul.addr %s243, 8
          %s245 = scalar_lea.vmem %s5, %s244
        $region36: #{tpu_custom_call.1} parent=15 // pred_fallthru
          _
      $region16: #{tpu_custom_call.1} parent=5 // pred_fallthru
        _
      %p246 = scmp.le.s32.totalorder 1, %s21
      %p247 = scmp.lt.s32.totalorder %s21, 7
      %p248 = pnand %p246, %p247
      %p249 = pneg %p248
      // Predicated region
      $region37: #{tpu_custom_call.1} parent=5 // pred_check
        _
      $region38: #{tpu_custom_call.1} parent=5 // pred_check_branch
        %251 = sbr.rel (%p248) target = $region40
      $region39: #{tpu_custom_call.1} parent=5 // pred_region
        %s252 = ssub.s32 %s21, 1
        %p253 = scmp.lt.s32.totalorder %s31, 1
        %s254 = scalar_select %p253, %s31, 1
        %s255 = smul.addr %s254, 8
        %s256 = scalar_lea.vmem %s1, %s255
        %p257 = pneg %p59
        %p258 = pneg %p56
        %s259 = smul.u32 16, %s30
        %p260 = scmp.lt.s32.totalorder %s259, 47
        %s261 = scalar_select %p260, %s259, 47
        %s262 = smul.addr %s261, 8
        %s263 = scalar_lea.vmem %s2, %s262
        %p264 = pneg %p85
        %p265 = pneg %p82
        %p266 = scmp.lt.s32.totalorder %s31, 1
        %s267 = scalar_select %p266, %s31, 1
        %s268 = smul.addr %s267, 8
        %s269 = scalar_lea.vmem %s3, %s268
        %p270 = pneg %p111
        %p271 = pneg %p108
        %p272 = scmp.lt.s32.totalorder %s30, 2
        %s273 = scalar_select %p272, %s30, 2
        %s274 = scalar_lea.vmem %s4, %s273
        %p275 = pneg %p137
        %p276 = pneg %p134
        %p277 = scmp.lt.s32.totalorder %s31, 1
        %s278 = scalar_select %p277, %s31, 1
        %s279 = smul.addr %s278, 8
        %s280 = scalar_lea.vmem %s5, %s279
        %p281 = pneg %p163
        %p282 = pneg %p160
        %p283 = pneg %p191
        %p284 = pneg %p188
        %s285 = sand.u32 %s178, 1
        %s286 = scalar_lea.sflag [#allocation5], %s285
        %s287 = sand.u32 %s178, 1
        %s288 = smul.addr %s287, 8
        %s289 = scalar_lea.vmem [#allocation4], %s288
        %p290 = scmp.lt.s32.totalorder %s31, 1
        %s291 = scalar_select %p290, %s31, 1
        %s292 = smul.addr %s291, 8
        %s293 = scalar_lea.vmem %s1, %s292
        %s294 = smul.u32 16, %s30
        %p295 = scmp.lt.s32.totalorder %s294, 47
        %s296 = scalar_select %p295, %s294, 47
        %s297 = smul.addr %s296, 8
        %s298 = scalar_lea.vmem %s2, %s297
        %s299 = smul.u32 16, %s30
        %p300 = scmp.lt.s32.totalorder %s31, 1
        %s301 = scalar_select %p300, %s31, 1
        %s302 = smul.addr %s301, 8
        %s303 = scalar_lea.vmem %s3, %s302
        %p304 = scmp.lt.s32.totalorder %s30, 2
        %s305 = scalar_select %p304, %s30, 2
        %s306 = scalar_lea.vmem %s4, %s305
        %p307 = scmp.lt.s32.totalorder %s31, 1
        %s308 = scalar_select %p307, %s31, 1
        %s309 = smul.addr %s308, 8
        %s310 = scalar_lea.vmem %s5, %s309
        %v311 = vld [vmem:[%s293] sm:$0xff]
        %v312 = vld [vmem:[%s298] sm:$0xff]
        %v313 = vld [vmem:[%s298 + $0x8] sm:$0xff]
        %v314 = vld [vmem:[%s298 + $0x10] sm:$0xff]
        %v315 = vld [vmem:[%s298 + $0x18] sm:$0xff]
        %v316 = vld [vmem:[%s298 + $0x20] sm:$0xff]
        %v317 = vld [vmem:[%s298 + $0x28] sm:$0xff]
        %v318 = vld [vmem:[%s298 + $0x30] sm:$0xff]
        %v319 = vld [vmem:[%s298 + $0x38] sm:$0xff]
        %v320 = vld [vmem:[%s298 + $0x40] sm:$0xff]
        %v321 = vld [vmem:[%s298 + $0x48] sm:$0xff]
        %v322 = vld [vmem:[%s298 + $0x50] sm:$0xff]
        %v323 = vld [vmem:[%s298 + $0x58] sm:$0xff]
        %v324 = vld [vmem:[%s298 + $0x60] sm:$0xff]
        %v325 = vld [vmem:[%s298 + $0x68] sm:$0xff]
        %v326 = vld [vmem:[%s298 + $0x70] sm:$0xff]
        %v327 = vld [vmem:[%s298 + $0x78] sm:$0xff]
        %vm328 = vcmask 261120
        %v330 = vsel %vm328, %v311, 0
        %v333 = vsel %vm328, %v312, 0
        %v336 = vsel %vm328, %v313, 0
        %v339 = vsel %vm328, %v314, 0
        %v342 = vsel %vm328, %v315, 0
        %v345 = vsel %vm328, %v316, 0
        %v348 = vsel %vm328, %v317, 0
        %v351 = vsel %vm328, %v318, 0
        %v354 = vsel %vm328, %v319, 0
        %v357 = vsel %vm328, %v320, 0
        %v360 = vsel %vm328, %v321, 0
        %v363 = vsel %vm328, %v322, 0
        %v366 = vsel %vm328, %v323, 0
        %v369 = vsel %vm328, %v324, 0
        %v372 = vsel %vm328, %v325, 0
        %v375 = vsel %vm328, %v326, 0
        %v378 = vsel %vm328, %v327, 0
        %380 = vmatprep.subr.mxu0 0.0
        %381 = vmatpush1.xpose.msra.mxu0 %v378
        %382 = vmatprep.subr.mxu0 0.0
        %383 = vmatpush1.xpose.msra.mxu0 %v375
        %384 = vmatprep.subr.mxu0 0.0
        %385 = vmatpush1.xpose.msra.mxu0 %v372
        %386 = vmatprep.subr.mxu0 0.0
        %387 = vmatpush1.xpose.msra.mxu0 %v369
        %388 = vmatprep.subr.mxu0 0.0
        %389 = vmatpush1.xpose.msra.mxu0 %v366
        %390 = vmatprep.subr.mxu0 0.0
        %391 = vmatpush1.xpose.msra.mxu0 %v363
        %392 = vmatprep.subr.mxu0 0.0
        %393 = vmatpush1.xpose.msra.mxu0 %v360
        %394 = vmatprep.subr.mxu0 0.0
        %395 = vmatpush1.xpose.msra.mxu0 %v357
        %396 = vmatprep.subr.mxu0 0.0
        %397 = vmatpush1.xpose.msra.mxu0 %v354
        %398 = vmatprep.subr.mxu0 0.0
        %399 = vmatpush1.xpose.msra.mxu0 %v351
        %400 = vmatprep.subr.mxu0 0.0
        %401 = vmatpush1.xpose.msra.mxu0 %v348
        %402 = vmatprep.subr.mxu0 0.0
        %403 = vmatpush1.xpose.msra.mxu0 %v345
        %404 = vmatprep.subr.mxu0 0.0
        %405 = vmatpush1.xpose.msra.mxu0 %v342
        %406 = vmatprep.subr.mxu0 0.0
        %407 = vmatpush1.xpose.msra.mxu0 %v339
        %408 = vmatprep.subr.mxu0 0.0
        %409 = vmatpush1.xpose.msra.mxu0 %v336
        %410 = vmatprep.subr.mxu0 0.0
        %411 = vmatpush1.xpose.msra.mxu0 %v333
        %412 = vmatprep.subr.mxu0 0.0
        %413 = vmatpush2.xpose.msra.mxu0 0.0
        %414 = vmatprep.subr.mxu0 0.0
        %415 = vmatpush2.xpose.msra.mxu0 0.0
        %416 = vmatprep.subr.mxu0 0.0
        %417 = vmatpush2.xpose.msra.mxu0 0.0
        %418 = vmatprep.subr.mxu0 0.0
        %419 = vmatpush2.xpose.msra.mxu0 0.0
        %420 = vmatprep.subr.mxu0 0.0
        %421 = vmatpush2.xpose.msra.mxu0 0.0
        %422 = vmatprep.subr.mxu0 0.0
        %423 = vmatpush2.xpose.msra.mxu0 0.0
        %424 = vmatprep.subr.mxu0 0.0
        %425 = vmatpush2.xpose.msra.mxu0 0.0
        %426 = vmatprep.subr.mxu0 0.0
        %427 = vmatpush2.xpose.msra.mxu0 0.0
        %428 = vmatprep.subr.mxu0 0.0
        %429 = vmatpush2.xpose.msra.mxu0 0.0
        %430 = vmatprep.subr.mxu0 0.0
        %431 = vmatpush2.xpose.msra.mxu0 0.0
        %432 = vmatprep.subr.mxu0 0.0
        %433 = vmatpush2.xpose.msra.mxu0 0.0
        %434 = vmatprep.subr.mxu0 0.0
        %435 = vmatpush2.xpose.msra.mxu0 0.0
        %436 = vmatprep.subr.mxu0 0.0
        %437 = vmatpush2.xpose.msra.mxu0 0.0
        %438 = vmatprep.subr.mxu0 0.0
        %439 = vmatpush2.xpose.msra.mxu0 0.0
        %440 = vmatprep.subr.mxu0 0.0
        %441 = vmatpush2.xpose.msra.mxu0 0.0
        %442 = vmatprep.subr.mxu0 0.0
        %443 = vmatpush2.xpose.msra.mxu0 0.0
        %444 = vmatprep.mubr.f32.mxu0 0.0
        %445 = vmatmul.mubr.f32.gmra.mxu0 %v330
        %v446 = vpop.f32.mrf.mxu0
        %v447 = vadd.f32 0.0, %v446
        %v448 = vpop.f32.mrf.mxu0
        %449 = vdwg.mxu0
        %v450 = vld [vmem:[%s303] sm:$0xff]
        %452 = vset.pattern.permute.xlu0 0
        %453 = vperm.xlu0 %452, %v450
        %v454 = vpop.permute.xlu0 %453
        %v456 = vmul.f32 %v447, %v454
        %v457 = vld [vmem:[%s306] sm:$0x1]
        %v459 = vlaneseq
        %v460 = vshrl.u32 %v459, 7
        %v461 = vsub.s32 0, %v460
        %v462 = vrot.slane %v457, %v461
        %v464 = vmul.f32 %v456, %v462
        %v465 = vmul.f32 %v464, 30.0
        %s466 = smul.u32 %s31, 3
        %s467 = sadd.s32 %s466, %s30
        %s468 = sld [smem:[#allocation3 + %s467]]
        %p469 = scmp.gt.s32.totalorder %s468, 0
        %p470 = scmp.le.s32.totalorder %s468, 0
        // Predicated region
        $region41: #{tpu_custom_call.1} parent=39 // pred_check
          %p471 = pneg %p470
        $region42: #{tpu_custom_call.1} parent=39 // pred_check_branch
          %473 = sbr.rel (%p471) target = $region44
        $region43: #{tpu_custom_call.1} parent=39 // pred_region
          %474 = vst [vmem:[%s289] sm:$0xff] %v465
        $region44: #{tpu_custom_call.1} parent=39 // pred_fallthru
          _
        // Predicated region
        $region45: #{tpu_custom_call.1} parent=39 // pred_check
          %p475 = pneg %p469
        $region46: #{tpu_custom_call.1} parent=39 // pred_check_branch
          %477 = sbr.rel (%p475) target = $region48
        $region47: #{tpu_custom_call.1} parent=39 // pred_region
          %v478 = vmul.f32 %v464, %v464
          %v479 = vsub.f32 1.0, %v478
          %v480 = vmax.f32 %v479, 0.0
          %v481 = vmin.f32 %v480, 1.0
          %v482 = vrsqrt.pop %v481
          %v483 = vmul.f32 %v481, %v482
          %vm484 = vcmp.eq.f32.partialorder %v481, inf
          %v485 = vsel %vm484, %v481, %v483
          %vm486 = vcmp.eq.f32.partialorder %v481, 0.0
          %v487 = vand.u32 %v481, 2147483648
          %v488 = vsel %vm486, %v487, %v485
          %v489 = vmul.f32 %v464, 0.87758255
          %v490 = vmul.f32 %v488, 0.47942555
          %v491 = vsub.f32 %v489, %v490
          %vm492 = vcmp.gt.f32.partialorder %v464, -0.87758255
          %v493 = vsub.f32 %v464, 0.23971277
          %v494 = vsel %vm492, %v491, %v493
          %s495 = smul.u32 %s30, 128
          %v496 = vlaneseq
          %v497 = vand.u32 %v496, 127
          %v498 = vstv %s495
          %v499 = vadd.s32 %v498, %v497
          %v500 = vld [vmem:[%s310] sm:$0xff]
          %501 = vset.pattern.permute.xlu0 0
          %502 = vperm.xlu0 %501, %v500
          %v503 = vpop.permute.xlu0 %502
          %vm504 = vcmp.eq.s32.totalorder %v499, %v503
          %v505 = vmul.f32 %v494, 30.0
          %v506 = vsel %vm504, %v505, %v465
          %507 = vst [vmem:[%s289] sm:$0xff] %v506
        $region48: #{tpu_custom_call.1} parent=39 // pred_fallthru
          _
        %s508 = sand.u32 %s178, 1
        %s509 = scalar_lea.sflag [#allocation5], %s508
        %s510 = sand.u32 %s178, 1
        %s511 = smul.addr %s510, 8
        %s512 = scalar_lea.vmem [#allocation4], %s511
        // Predicated region
        $region49: #{tpu_custom_call.1} parent=39 // pred_check
          %p513 = pneg %p188
        $region50: #{tpu_custom_call.1} parent=39 // pred_check_branch
          %515 = sbr.rel (%p513) target = $region52
        $region51: #{tpu_custom_call.1} parent=39 // pred_region
          %s517 = ssub.s32 128, 128
          %518 = vsyncadd %s509, %s517
          %s519 = smul.addr %s31, 3
          %s520 = sadd.s32 %s30, %s519
          %s521 = smul.addr %s520, 128
          %s522 = scalar_lea.hbm %s6, %s521
          %s524 = sshll.u32 %s512, 4
          %s525 = int_to_ptr.vmem [resolvable:$true] %s524
          %527 = dma.vmem_to_hbm [thread:$0]  %s525, 128, %s522, %s509
        $region52: #{tpu_custom_call.1} parent=39 // pred_fallthru
          _
      $region40: #{tpu_custom_call.1} parent=5 // pred_fallthru
        _
      %p528 = scmp.le.s32.totalorder 2, %s21
      // Predicated region
      $region53: #{tpu_custom_call.1} parent=5 // pred_check
        %p529 = pneg %p528
      $region54: #{tpu_custom_call.1} parent=5 // pred_check_branch
        %531 = sbr.rel (%p529) target = $region56
      $region55: #{tpu_custom_call.1} parent=5 // pred_region
        %s532 = ssub.s32 %s21, 2
        // Predicated region
        $region57: #{tpu_custom_call.1} parent=55 // pred_check
          %p533 = pneg %p194
        $region58: #{tpu_custom_call.1} parent=55 // pred_check_branch
          %535 = sbr.rel (%p533) target = $region60
        $region59: #{tpu_custom_call.1} parent=55 // pred_region
          %s536 = sand.u32 %s179, 1
          %s537 = scalar_lea.sflag [#allocation5], %s536
          %s538 = sand.u32 %s179, 1
          %s539 = smul.addr %s538, 8
          %s540 = scalar_lea.vmem [#allocation4], %s539
          %541 = dma.done %s537, 128
        $region60: #{tpu_custom_call.1} parent=55 // pred_fallthru
          _
      $region56: #{tpu_custom_call.1} parent=5 // pred_fallthru
        _
    $region6: #{tpu_custom_call.1} parent=1 // loop_footer
      %s25 = sadd.s32 1, %s21
    $region7: #{tpu_custom_call.1} parent=1 // loop_footer_branch
      %20 = sbr.rel target = $region3
    $region8: #{tpu_custom_call.1} parent=1 // loop_exit
      _
    %542 = vsyncpa [#allocation5], 1
    %s543 = scalar_lea.sflag [#allocation5], 1
    %544 = vsyncpa %s543, 1

</llo_original>
